<compile_context>
chip_gen: v5e
topology: v5e:2x2
jax: 0.10.0
libtpu: 0.0.40
codegen_flags: <defaults>
</compile_context>

<pallas_src>
import math

import jax
import jax.numpy as jnp
from jax.experimental import pallas as pl
from jax.experimental.pallas import tpu as pltpu

LANE = 128


def _round_up(n, m):
    return ((n + m - 1) // m) * m


# ---------------------------------------------------------------------------
# Kernel: 4 matmuls + 3 ReLUs, all operands resident in VMEM.
# x is bf16; MXU accumulates in f32; bias/ReLU epilogue in f32; *100 pre-folded.
# ---------------------------------------------------------------------------
def _mlp_kernel(x_ref,
                w1_ref, b1_ref,
                w2_ref, b2_ref,
                w3_ref, b3_ref,
                w4_ref, b4_ref,
                o_ref):
    x = x_ref[...]  # already bf16 (cast once in the wrapper)

    h = jnp.dot(x, w1_ref[...], preferred_element_type=jnp.float32) + b1_ref[...]
    h = jnp.maximum(h, 0.0)

    h = jnp.dot(h.astype(w2_ref.dtype), w2_ref[...],
                preferred_element_type=jnp.float32) + b2_ref[...]
    h = jnp.maximum(h, 0.0)

    h = jnp.dot(h.astype(w3_ref.dtype), w3_ref[...],
                preferred_element_type=jnp.float32) + b3_ref[...]
    h = jnp.maximum(h, 0.0)

    # *100.0 already folded into w4/b4 at parameter-prep time.
    out = jnp.dot(h.astype(w4_ref.dtype), w4_ref[...],
                  preferred_element_type=jnp.float32) + b4_ref[...]
    o_ref[...] = out.astype(o_ref.dtype)


# ---------------------------------------------------------------------------
# Parameter prep: pad feature dims to lane multiples, fold the *100 scale into
# the last layer, cast weights to bf16 (biases stay f32 for the VPU epilogue).
# ---------------------------------------------------------------------------
def prepare_params(params, weight_dtype=jnp.bfloat16):
    input_dim, hidden_dim = params["w1"].shape
    output_dim = params["w4"].shape[1]
    in_pad = _round_up(input_dim, LANE)
    hid_pad = _round_up(hidden_dim, LANE)
    out_pad = _round_up(output_dim, LANE)

    def pad_w(w, rows, cols):
        return jnp.zeros((rows, cols), jnp.float32).at[:w.shape[0], :w.shape[1]].set(w)

    def pad_b(b, cols):
        b = b.reshape(1, -1)
        return jnp.zeros((1, cols), jnp.float32).at[:, :b.shape[1]].set(b)

    w4 = params["w4"] * 100.0
    b4 = params["b4"] * 100.0

    return {
        "w1": pad_w(params["w1"], in_pad, hid_pad).astype(weight_dtype),
        "b1": pad_b(params["b1"], hid_pad),
        "w2": pad_w(params["w2"], hid_pad, hid_pad).astype(weight_dtype),
        "b2": pad_b(params["b2"], hid_pad),
        "w3": pad_w(params["w3"], hid_pad, hid_pad).astype(weight_dtype),
        "b3": pad_b(params["b3"], hid_pad),
        "w4": pad_w(w4, hid_pad, out_pad).astype(weight_dtype),
        "b4": pad_b(b4, out_pad),
        "dims": (input_dim, hidden_dim, output_dim),
        "padded_dims": (in_pad, hid_pad, out_pad),
        "weight_dtype": weight_dtype,
    }


# ---------------------------------------------------------------------------
# Batched MLP over a (M, input_dim) activation via one pallas_call.
# ---------------------------------------------------------------------------
def run_number_decoder_mlp(x2d, prepared, tile_m=128):
    input_dim, _, output_dim = prepared["dims"]
    in_pad, _, out_pad = prepared["padded_dims"]
    m = x2d.shape[0]
    assert x2d.shape[1] == input_dim

    m_pad = _round_up(max(m, 1), tile_m)
    x_pad = jnp.zeros((m_pad, in_pad), jnp.float32)
    x_pad = x_pad.at[:m, :input_dim].set(x2d.astype(jnp.float32))
    x_pad = x_pad.astype(prepared["weight_dtype"])

    grid_m = m_pad // tile_m

    def resident(shape):
        # Same block index for every grid step -> stays resident in VMEM.
        return pl.BlockSpec(shape, lambda i: (0, 0))

    in_specs = [
        pl.BlockSpec((tile_m, in_pad), lambda i: (i, 0)),
        resident(prepared["w1"].shape), resident(prepared["b1"].shape),
        resident(prepared["w2"].shape), resident(prepared["b2"].shape),
        resident(prepared["w3"].shape), resident(prepared["b3"].shape),
        resident(prepared["w4"].shape), resident(prepared["b4"].shape),
    ]
    out_spec = pl.BlockSpec((tile_m, out_pad), lambda i: (i, 0))

    hid_pad = prepared["padded_dims"][1]
    flops = 2 * m_pad * (in_pad * hid_pad + 2 * hid_pad * hid_pad + hid_pad * out_pad)
    bytes_accessed = (
        x_pad.size * x_pad.dtype.itemsize
        + sum(prepared[k].size * prepared[k].dtype.itemsize
              for k in ("w1", "b1", "w2", "b2", "w3", "b3", "w4", "b4"))
        + m_pad * out_pad * 4)

    out_full = pl.pallas_call(
        _mlp_kernel,
        out_shape=jax.ShapeDtypeStruct((m_pad, out_pad), jnp.float32),
        grid=(grid_m,),
        in_specs=in_specs,
        out_specs=out_spec,
        compiler_params=pltpu.CompilerParams(
            dimension_semantics=("parallel",)),
        cost_estimate=pl.CostEstimate(
            flops=flops, transcendentals=0, bytes_accessed=bytes_accessed),
    )(x_pad,
      prepared["w1"], prepared["b1"],
      prepared["w2"], prepared["b2"],
      prepared["w3"], prepared["b3"],
      prepared["w4"], prepared["b4"])

    return out_full[:m, :output_dim]


def number_decoder_forward(number_embedding, prepared, tile_m=128):
    """Mirrors NumberDecoder.forward: (1, 1, input_dim) -> (output_dim,) * 100."""
    orig_shape = number_embedding.shape
    input_dim, _, output_dim = prepared["dims"]
    assert orig_shape[-1] == input_dim
    x2d = number_embedding.reshape(-1, input_dim)
    out2d = run_number_decoder_mlp(x2d, prepared, tile_m=tile_m)
    out = out2d.reshape(orig_shape[:-1] + (output_dim,))
    # *100 already folded into the last layer; squeeze matches the module.
    return jnp.squeeze(jnp.squeeze(out, axis=0), axis=0)


# ---------------------------------------------------------------------------
# Init (matches the module's _initialize_parameters: kaiming_uniform relu gain,
# zero biases). Weights stored as (in, out) so the kernel computes x @ W + b.
# ---------------------------------------------------------------------------
def init_params(key, input_dim, hidden_dim, output_dim):
    dims = [(input_dim, hidden_dim),
            (hidden_dim, hidden_dim),
            (hidden_dim, hidden_dim),
            (hidden_dim, output_dim)]
    params = {}
    for i, (fan_in, fan_out) in enumerate(dims, start=1):
        key, sub = jax.random.split(key)
        bound = math.sqrt(2.0) * math.sqrt(3.0 / fan_in)   # relu gain
        params[f"w{i}"] = jax.random.uniform(
            sub, (fan_in, fan_out), jnp.float32, minval=-bound, maxval=bound)
        params[f"b{i}"] = jnp.zeros((1, fan_out), jnp.float32)
    return params


# ---------------------------------------------------------------------------
# References
# ---------------------------------------------------------------------------
def _reference_prepared(x2d, prepared):
    """Plain-JAX path using the same prepared (bf16, padded, scale-folded) params."""
    dt = prepared["weight_dtype"]
    input_dim, _, output_dim = prepared["dims"]
    in_pad = prepared["padded_dims"][0]
    m = x2d.shape[0]
    xp = jnp.zeros((m, in_pad), jnp.float32).at[:, :input_dim].set(
        x2d.astype(jnp.float32)).astype(dt)
    h = jnp.maximum(jnp.dot(xp, prepared["w1"],
                            preferred_element_type=jnp.float32) + prepared["b1"], 0.0)
    h = jnp.maximum(jnp.dot(h.astype(dt), prepared["w2"],
                            preferred_element_type=jnp.float32) + prepared["b2"], 0.0)
    h = jnp.maximum(jnp.dot(h.astype(dt), prepared["w3"],
                            preferred_element_type=jnp.float32) + prepared["b3"], 0.0)
    out = jnp.dot(h.astype(dt), prepared["w4"],
                  preferred_element_type=jnp.float32) + prepared["b4"]
    return out[:, :output_dim]


def _reference_module_f32(number_embedding, params):
    """Full-f32 reference of the original module forward."""
    x = number_embedding.reshape(-1, number_embedding.shape[-1])
    h = jnp.maximum(x @ params["w1"] + params["b1"], 0.0)
    h = jnp.maximum(h @ params["w2"] + params["b2"], 0.0)
    h = jnp.maximum(h @ params["w3"] + params["b3"], 0.0)
    out = h @ params["w4"] + params["b4"]
    out = out.reshape(number_embedding.shape[:-1] + (params["w4"].shape[1],))
    return jnp.squeeze(jnp.squeeze(out, axis=0), axis=0) * 100.0


if __name__ == "__main__":
    input_dim, hidden_dim, output_dim = 32, 64, 8

    key = jax.random.PRNGKey(0)
    key, pkey, xkey, bkey = jax.random.split(key, 4)
    params = init_params(pkey, input_dim, hidden_dim, output_dim)
    prepared = prepare_params(params, weight_dtype=jnp.bfloat16)

    # 1) Module-shaped call: (1, 1, input_dim) -> (output_dim,)
    number_embedding = jax.random.normal(xkey, (1, 1, input_dim), jnp.float32)
    out = jax.block_until_ready(number_decoder_forward(number_embedding, prepared))
    assert out.shape == (output_dim,), out.shape

    # Strict check vs. same-precision (bf16 weights, f32 acc) reference.
    ref_same = _reference_prepared(number_embedding.reshape(-1, input_dim), prepared)[0]
    assert jnp.allclose(out, ref_same, atol=1e-3, rtol=1e-3), (out, ref_same)

    # Loose sanity check vs. full-f32 module reference (bf16 weight quantization).
    ref_f32 = _reference_module_f32(number_embedding, params)
    rel_err = jnp.linalg.norm(out - ref_f32) / (jnp.linalg.norm(ref_f32) + 1e-6)
    assert rel_err < 2e-2, (rel_err, out, ref_f32)

    # 2) Batched call: 256 rows through one launch, weights VMEM-resident across grid.
    xb = jax.random.normal(bkey, (256, input_dim), jnp.float32)
    outb = jax.block_until_ready(run_number_decoder_mlp(xb, prepared, tile_m=128))
    refb = _reference_prepared(xb, prepared)
    assert outb.shape == (256, output_dim), outb.shape
    assert jnp.allclose(outb, refb, atol=1e-3, rtol=1e-3)

    print("KERNEL_OK")
</pallas_src>

<mosaic_0001>
module attributes {stable_mosaic.version = 11 : i64} {
  func.func @_mlp_kernel(%arg0: i32, %arg1: memref<128x128xbf16, #tpu.memory_space<vmem>>, %arg2: memref<128x128xbf16, #tpu.memory_space<vmem>>, %arg3: memref<1x128xf32, #tpu.memory_space<vmem>>, %arg4: memref<128x128xbf16, #tpu.memory_space<vmem>>, %arg5: memref<1x128xf32, #tpu.memory_space<vmem>>, %arg6: memref<128x128xbf16, #tpu.memory_space<vmem>>, %arg7: memref<1x128xf32, #tpu.memory_space<vmem>>, %arg8: memref<128x128xbf16, #tpu.memory_space<vmem>>, %arg9: memref<1x128xf32, #tpu.memory_space<vmem>>, %arg10: memref<128x128xf32, #tpu.memory_space<vmem>>) attributes {dimension_semantics = [#tpu.dimension_semantics<parallel>], iteration_bounds = array<i64: 1>, scalar_prefetch = 0 : i64, scratch_operands = 0 : i64, tpu.core_type = #tpu.core_type<tc>, window_params = [{transform_indices = @transform_0, window_bounds = array<i64: 128, 128>}, {pipeline_mode = #tpu.pipeline_mode<synchronous>, transform_indices = @transform_1, window_bounds = array<i64: 128, 128>}, {pipeline_mode = #tpu.pipeline_mode<synchronous>, transform_indices = @transform_2, window_bounds = array<i64: 1, 128>}, {pipeline_mode = #tpu.pipeline_mode<synchronous>, transform_indices = @transform_3, window_bounds = array<i64: 128, 128>}, {pipeline_mode = #tpu.pipeline_mode<synchronous>, transform_indices = @transform_4, window_bounds = array<i64: 1, 128>}, {pipeline_mode = #tpu.pipeline_mode<synchronous>, transform_indices = @transform_5, window_bounds = array<i64: 128, 128>}, {pipeline_mode = #tpu.pipeline_mode<synchronous>, transform_indices = @transform_6, window_bounds = array<i64: 1, 128>}, {pipeline_mode = #tpu.pipeline_mode<synchronous>, transform_indices = @transform_7, window_bounds = array<i64: 128, 128>}, {pipeline_mode = #tpu.pipeline_mode<synchronous>, transform_indices = @transform_8, window_bounds = array<i64: 1, 128>}, {transform_indices = @transform_9, window_bounds = array<i64: 128, 128>}]} {
    %c0 = arith.constant 0 : index
    %c0_0 = arith.constant 0 : index
    %0 = vector.load %arg1[%c0, %c0_0] : memref<128x128xbf16, #tpu.memory_space<vmem>>, vector<128x128xbf16>
    %c0_1 = arith.constant 0 : index
    %c0_2 = arith.constant 0 : index
    %1 = vector.load %arg2[%c0_1, %c0_2] : memref<128x128xbf16, #tpu.memory_space<vmem>>, vector<128x128xbf16>
    %cst = arith.constant dense<0.000000e+00> : vector<128x128xf32>
    %2 = tpu.matmul %0, %1, %cst {dimension_numbers = #tpu.dot_dimension_numbers<[1], [0], [0], [1], [0, 0, 1, 1], [], []>} : vector<128x128xbf16>, vector<128x128xbf16>, vector<128x128xf32> -> vector<128x128xf32>
    %c0_3 = arith.constant 0 : index
    %c0_4 = arith.constant 0 : index
    %3 = vector.load %arg3[%c0_3, %c0_4] : memref<1x128xf32, #tpu.memory_space<vmem>>, vector<1x128xf32>
    %4 = vector.broadcast %3 : vector<1x128xf32> to vector<128x128xf32>
    %5 = arith.addf %2, %4 : vector<128x128xf32>
    %cst_5 = arith.constant 0.000000e+00 : f32
    %6 = vector.broadcast %cst_5 : f32 to vector<128x128xf32>
    %7 = arith.maximumf %5, %6 : vector<128x128xf32>
    %8 = arith.truncf %7 : vector<128x128xf32> to vector<128x128xbf16>
    %c0_6 = arith.constant 0 : index
    %c0_7 = arith.constant 0 : index
    %9 = vector.load %arg4[%c0_6, %c0_7] : memref<128x128xbf16, #tpu.memory_space<vmem>>, vector<128x128xbf16>
    %cst_8 = arith.constant dense<0.000000e+00> : vector<128x128xf32>
    %10 = tpu.matmul %8, %9, %cst_8 {dimension_numbers = #tpu.dot_dimension_numbers<[1], [0], [0], [1], [0, 0, 1, 1], [], []>} : vector<128x128xbf16>, vector<128x128xbf16>, vector<128x128xf32> -> vector<128x128xf32>
    %c0_9 = arith.constant 0 : index
    %c0_10 = arith.constant 0 : index
    %11 = vector.load %arg5[%c0_9, %c0_10] : memref<1x128xf32, #tpu.memory_space<vmem>>, vector<1x128xf32>
    %12 = vector.broadcast %11 : vector<1x128xf32> to vector<128x128xf32>
    %13 = arith.addf %10, %12 : vector<128x128xf32>
    %cst_11 = arith.constant 0.000000e+00 : f32
    %14 = vector.broadcast %cst_11 : f32 to vector<128x128xf32>
    %15 = arith.maximumf %13, %14 : vector<128x128xf32>
    %16 = arith.truncf %15 : vector<128x128xf32> to vector<128x128xbf16>
    %c0_12 = arith.constant 0 : index
    %c0_13 = arith.constant 0 : index
    %17 = vector.load %arg6[%c0_12, %c0_13] : memref<128x128xbf16, #tpu.memory_space<vmem>>, vector<128x128xbf16>
    %cst_14 = arith.constant dense<0.000000e+00> : vector<128x128xf32>
    %18 = tpu.matmul %16, %17, %cst_14 {dimension_numbers = #tpu.dot_dimension_numbers<[1], [0], [0], [1], [0, 0, 1, 1], [], []>} : vector<128x128xbf16>, vector<128x128xbf16>, vector<128x128xf32> -> vector<128x128xf32>
    %c0_15 = arith.constant 0 : index
    %c0_16 = arith.constant 0 : index
    %19 = vector.load %arg7[%c0_15, %c0_16] : memref<1x128xf32, #tpu.memory_space<vmem>>, vector<1x128xf32>
    %20 = vector.broadcast %19 : vector<1x128xf32> to vector<128x128xf32>
    %21 = arith.addf %18, %20 : vector<128x128xf32>
    %cst_17 = arith.constant 0.000000e+00 : f32
    %22 = vector.broadcast %cst_17 : f32 to vector<128x128xf32>
    %23 = arith.maximumf %21, %22 : vector<128x128xf32>
    %24 = arith.truncf %23 : vector<128x128xf32> to vector<128x128xbf16>
    %c0_18 = arith.constant 0 : index
    %c0_19 = arith.constant 0 : index
    %25 = vector.load %arg8[%c0_18, %c0_19] : memref<128x128xbf16, #tpu.memory_space<vmem>>, vector<128x128xbf16>
    %cst_20 = arith.constant dense<0.000000e+00> : vector<128x128xf32>
    %26 = tpu.matmul %24, %25, %cst_20 {dimension_numbers = #tpu.dot_dimension_numbers<[1], [0], [0], [1], [0, 0, 1, 1], [], []>} : vector<128x128xbf16>, vector<128x128xbf16>, vector<128x128xf32> -> vector<128x128xf32>
    %c0_21 = arith.constant 0 : index
    %c0_22 = arith.constant 0 : index
    %27 = vector.load %arg9[%c0_21, %c0_22] : memref<1x128xf32, #tpu.memory_space<vmem>>, vector<1x128xf32>
    %28 = vector.broadcast %27 : vector<1x128xf32> to vector<128x128xf32>
    %29 = arith.addf %26, %28 : vector<128x128xf32>
    %c0_23 = arith.constant 0 : index
    %c0_24 = arith.constant 0 : index
    %30 = vector.load %arg10[%c0_23, %c0_24] : memref<128x128xf32, #tpu.memory_space<vmem>>, vector<128x128xf32>
    tpu.vector_store %arg10[%c0_23, %c0_24], %29 {strides = array<i32>} : memref<128x128xf32, #tpu.memory_space<vmem>>, vector<128x128xf32>,
    return
  }
  func.func @transform_0(%arg0: i32) -> (i32, i32) {
    %c0_i32 = arith.constant 0 : i32
    %c0_i32_0 = arith.constant 0 : i32
    return %arg0, %c0_i32 : i32, i32
  }
  func.func @transform_1(%arg0: i32) -> (i32, i32) {
    %c0_i32 = arith.constant 0 : i32
    %c0_i32_0 = arith.constant 0 : i32
    %c0_i32_1 = arith.constant 0 : i32
    return %c0_i32, %c0_i32_0 : i32, i32
  }
  func.func @transform_2(%arg0: i32) -> (i32, i32) {
    %c0_i32 = arith.constant 0 : i32
    %c0_i32_0 = arith.constant 0 : i32
    %c0_i32_1 = arith.constant 0 : i32
    return %c0_i32, %c0_i32_0 : i32, i32
  }
  func.func @transform_3(%arg0: i32) -> (i32, i32) {
    %c0_i32 = arith.constant 0 : i32
    %c0_i32_0 = arith.constant 0 : i32
    %c0_i32_1 = arith.constant 0 : i32
    return %c0_i32, %c0_i32_0 : i32, i32
  }
  func.func @transform_4(%arg0: i32) -> (i32, i32) {
    %c0_i32 = arith.constant 0 : i32
    %c0_i32_0 = arith.constant 0 : i32
    %c0_i32_1 = arith.constant 0 : i32
    return %c0_i32, %c0_i32_0 : i32, i32
  }
  func.func @transform_5(%arg0: i32) -> (i32, i32) {
    %c0_i32 = arith.constant 0 : i32
    %c0_i32_0 = arith.constant 0 : i32
    %c0_i32_1 = arith.constant 0 : i32
    return %c0_i32, %c0_i32_0 : i32, i32
  }
  func.func @transform_6(%arg0: i32) -> (i32, i32) {
    %c0_i32 = arith.constant 0 : i32
    %c0_i32_0 = arith.constant 0 : i32
    %c0_i32_1 = arith.constant 0 : i32
    return %c0_i32, %c0_i32_0 : i32, i32
  }
  func.func @transform_7(%arg0: i32) -> (i32, i32) {
    %c0_i32 = arith.constant 0 : i32
    %c0_i32_0 = arith.constant 0 : i32
    %c0_i32_1 = arith.constant 0 : i32
    return %c0_i32, %c0_i32_0 : i32, i32
  }
  func.func @transform_8(%arg0: i32) -> (i32, i32) {
    %c0_i32 = arith.constant 0 : i32
    %c0_i32_0 = arith.constant 0 : i32
    %c0_i32_1 = arith.constant 0 : i32
    return %c0_i32, %c0_i32_0 : i32, i32
  }
  func.func @transform_9(%arg0: i32) -> (i32, i32) {
    %c0_i32 = arith.constant 0 : i32
    %c0_i32_0 = arith.constant 0 : i32
    return %arg0, %c0_i32 : i32, i32
  }
}

</mosaic_0001>

<llo_original>
// kernel: tpu_custom_call.1
$region0: #{tpu_custom_call.1}
  #allocation0 [shape = 'u32[]', space=smem, size = 0x4, offset = 0x4, fixed_abs, tag = 'smem constant byte address 0x4 - core index']
  #allocation1 [shape = 'u32[72,128]{1,0:T(1,128)}', space=vmem, size = 0x9000, scoped, tag = 'internal scratch']
  %s0 = inlined_call_operand.hbm [shape: bf16[128,128], index: 0, kind: input, shape index: {}]
  %s1 = inlined_call_operand.hbm [shape: bf16[128,128], index: 1, kind: input, shape index: {}]
  %s2 = inlined_call_operand.vmem [shape: f32[1,128], index: 2, kind: input, shape index: {}]
  %s3 = inlined_call_operand.hbm [shape: bf16[128,128], index: 3, kind: input, shape index: {}]
  %s4 = inlined_call_operand.vmem [shape: f32[1,128], index: 4, kind: input, shape index: {}]
  %s5 = inlined_call_operand.hbm [shape: bf16[128,128], index: 5, kind: input, shape index: {}]
  %s6 = inlined_call_operand.vmem [shape: f32[1,128], index: 6, kind: input, shape index: {}]
  %s7 = inlined_call_operand.hbm [shape: bf16[128,128], index: 7, kind: input, shape index: {}]
  %s8 = inlined_call_operand.vmem [shape: f32[1,128], index: 8, kind: input, shape index: {}]
  %s9 = inlined_call_operand.hbm [shape: f32[128,128], index: 9, kind: output, shape index: {}]
  %s10 = sld [smem:[#allocation0]]
  $region66: #{tpu_custom_call.1} parent=0
    _
  %s12 = ssub.s32 1, %s10
  %s13 = scalar_select 0, %s12, %s10
  $region1: #{tpu_custom_call.1} parent=0
    #allocation2 [shape = 'u8[32768]{0}', space=vmem, size = 0x8000, scoped, tag = 'input window, operand 0, single buffered']
    #allocation3 [shape = 's32[1]{0}', space=sflag, size = 0x4, scoped, tag = 'scoped memory for tpu_custom_call.1']
    #allocation4 [shape = 's32[1]{0}', space=sflag, size = 0x4, scoped, tag = 'scoped memory for tpu_custom_call.1']
    #allocation5 [shape = 'u8[32768]{0}', space=vmem, size = 0x8000, scoped, tag = 'input window, operand 1, single buffered']
    #allocation6 [shape = 's32[1]{0}', space=sflag, size = 0x4, scoped, tag = 'scoped memory for tpu_custom_call.1']
    #allocation7 [shape = 'u8[32768]{0}', space=vmem, size = 0x8000, scoped, tag = 'input window, operand 3, single buffered']
    #allocation8 [shape = 'u8[32768]{0}', space=vmem, size = 0x8000, scoped, tag = 'input window, operand 5, single buffered']
    #allocation9 [shape = 's32[1]{0}', space=sflag, size = 0x4, scoped, tag = 'scoped memory for tpu_custom_call.1']
    #allocation10 [shape = 'u8[32768]{0}', space=vmem, size = 0x8000, scoped, tag = 'input window, operand 7, single buffered']
    #allocation11 [shape = 'u8[65536]{0}', space=vmem, size = 0x10000, scoped, tag = 'output window, operand 0, single buffered']
    %14 = vsyncpa [#allocation3], 0
    %15 = vsyncpa [#allocation6], 0
    %16 = vsyncpa [#allocation9], 0
    %17 = vsyncpa [#allocation4], 0
    // Predicated region
    $region2: #{tpu_custom_call.1} parent=1 // pred_check
      _
    $region3: #{tpu_custom_call.1} parent=1 // pred_check_branch
      %19 = sbr.rel (0) target = $region5
    $region4: #{tpu_custom_call.1} parent=1 // pred_region
      %21 = vsyncadd [#allocation3], 0
      %s22 = sshll.u32 %s0, 4
      %s23 = int_to_ptr.hbm [resolvable:$true] %s22
      %s24 = sshll.u32 [#allocation2], 4
      %s25 = int_to_ptr.vmem [resolvable:$true] %s24
      %30 = dma.hbm_to_vmem [thread:$0]  %s23, 1024, %s25, [#allocation3], 64, 64, 4
    $region5: #{tpu_custom_call.1} parent=1 // pred_fallthru
      _
    // Predicated region
    $region6: #{tpu_custom_call.1} parent=1 // pred_check
      _
    $region7: #{tpu_custom_call.1} parent=1 // pred_check_branch
      %32 = sbr.rel (0) target = $region9
    $region8: #{tpu_custom_call.1} parent=1 // pred_region
      %34 = vsyncadd [#allocation6], 0
      %s35 = sshll.u32 %s1, 4
      %s36 = int_to_ptr.hbm [resolvable:$true] %s35
      %s37 = sshll.u32 [#allocation5], 4
      %s38 = int_to_ptr.vmem [resolvable:$true] %s37
      %43 = dma.hbm_to_vmem [thread:$0]  %s36, 1024, %s38, [#allocation6], 64, 64, 4
    $region9: #{tpu_custom_call.1} parent=1 // pred_fallthru
      _
    // Predicated region
    $region10: #{tpu_custom_call.1} parent=1 // pred_check
      _
    $region11: #{tpu_custom_call.1} parent=1 // pred_check_branch
      %45 = sbr.rel (0) target = $region13
    $region12: #{tpu_custom_call.1} parent=1 // pred_region
      _
    $region13: #{tpu_custom_call.1} parent=1 // pred_fallthru
      _
    // Predicated region
    $region14: #{tpu_custom_call.1} parent=1 // pred_check
      _
    $region15: #{tpu_custom_call.1} parent=1 // pred_check_branch
      %47 = sbr.rel (0) target = $region17
    $region16: #{tpu_custom_call.1} parent=1 // pred_region
      %49 = vsyncadd [#allocation6], 0
      %s50 = sshll.u32 %s3, 4
      %s51 = int_to_ptr.hbm [resolvable:$true] %s50
      %s52 = sshll.u32 [#allocation7], 4
      %s53 = int_to_ptr.vmem [resolvable:$true] %s52
      %58 = dma.hbm_to_vmem [thread:$0]  %s51, 1024, %s53, [#allocation6], 64, 64, 4
    $region17: #{tpu_custom_call.1} parent=1 // pred_fallthru
      _
    // Predicated region
    $region18: #{tpu_custom_call.1} parent=1 // pred_check
      _
    $region19: #{tpu_custom_call.1} parent=1 // pred_check_branch
      %60 = sbr.rel (0) target = $region21
    $region20: #{tpu_custom_call.1} parent=1 // pred_region
      _
    $region21: #{tpu_custom_call.1} parent=1 // pred_fallthru
      _
    // Predicated region
    $region22: #{tpu_custom_call.1} parent=1 // pred_check
      _
    $region23: #{tpu_custom_call.1} parent=1 // pred_check_branch
      %62 = sbr.rel (0) target = $region25
    $region24: #{tpu_custom_call.1} parent=1 // pred_region
      %64 = vsyncadd [#allocation9], 0
      %s65 = sshll.u32 %s5, 4
      %s66 = int_to_ptr.hbm [resolvable:$true] %s65
      %s67 = sshll.u32 [#allocation8], 4
      %s68 = int_to_ptr.vmem [resolvable:$true] %s67
      %73 = dma.hbm_to_vmem [thread:$0]  %s66, 1024, %s68, [#allocation9], 64, 64, 4
    $region25: #{tpu_custom_call.1} parent=1 // pred_fallthru
      _
    // Predicated region
    $region26: #{tpu_custom_call.1} parent=1 // pred_check
      _
    $region27: #{tpu_custom_call.1} parent=1 // pred_check_branch
      %75 = sbr.rel (0) target = $region29
    $region28: #{tpu_custom_call.1} parent=1 // pred_region
      _
    $region29: #{tpu_custom_call.1} parent=1 // pred_fallthru
      _
    // Predicated region
    $region30: #{tpu_custom_call.1} parent=1 // pred_check
      _
    $region31: #{tpu_custom_call.1} parent=1 // pred_check_branch
      %77 = sbr.rel (0) target = $region33
    $region32: #{tpu_custom_call.1} parent=1 // pred_region
      %79 = vsyncadd [#allocation9], 0
      %s80 = sshll.u32 %s7, 4
      %s81 = int_to_ptr.hbm [resolvable:$true] %s80
      %s82 = sshll.u32 [#allocation10], 4
      %s83 = int_to_ptr.vmem [resolvable:$true] %s82
      %88 = dma.hbm_to_vmem [thread:$0]  %s81, 1024, %s83, [#allocation9], 64, 64, 4
    $region33: #{tpu_custom_call.1} parent=1 // pred_fallthru
      _
    // Predicated region
    $region34: #{tpu_custom_call.1} parent=1 // pred_check
      _
    $region35: #{tpu_custom_call.1} parent=1 // pred_check_branch
      %90 = sbr.rel (0) target = $region37
    $region36: #{tpu_custom_call.1} parent=1 // pred_region
      _
    $region37: #{tpu_custom_call.1} parent=1 // pred_fallthru
      _
    // Predicated region
    $region38: #{tpu_custom_call.1} parent=1 // pred_check
      _
    $region39: #{tpu_custom_call.1} parent=1 // pred_check_branch
      %92 = sbr.rel (0) target = $region41
    $region40: #{tpu_custom_call.1} parent=1 // pred_region
      %94 = dma.done [#allocation3], 1024
    $region41: #{tpu_custom_call.1} parent=1 // pred_fallthru
      _
    // Predicated region
    $region42: #{tpu_custom_call.1} parent=1 // pred_check
      _
    $region43: #{tpu_custom_call.1} parent=1 // pred_check_branch
      %96 = sbr.rel (0) target = $region45
    $region44: #{tpu_custom_call.1} parent=1 // pred_region
      %98 = dma.done [#allocation6], 1024
    $region45: #{tpu_custom_call.1} parent=1 // pred_fallthru
      _
    // Predicated region
    $region46: #{tpu_custom_call.1} parent=1 // pred_check
      _
    $region47: #{tpu_custom_call.1} parent=1 // pred_check_branch
      %100 = sbr.rel (0) target = $region49
    $region48: #{tpu_custom_call.1} parent=1 // pred_region
      %102 = dma.done [#allocation6], 1024
    $region49: #{tpu_custom_call.1} parent=1 // pred_fallthru
      _
    // Predicated region
    $region50: #{tpu_custom_call.1} parent=1 // pred_check
      _
    $region51: #{tpu_custom_call.1} parent=1 // pred_check_branch
      %104 = sbr.rel (0) target = $region53
    $region52: #{tpu_custom_call.1} parent=1 // pred_region
      %106 = dma.done [#allocation9], 1024
    $region53: #{tpu_custom_call.1} parent=1 // pred_fallthru
      _
    // Predicated region
    $region54: #{tpu_custom_call.1} parent=1 // pred_check
      _
    $region55: #{tpu_custom_call.1} parent=1 // pred_check_branch
      %108 = sbr.rel (0) target = $region57
    $region56: #{tpu_custom_call.1} parent=1 // pred_region
      %110 = dma.done [#allocation9], 1024
    $region57: #{tpu_custom_call.1} parent=1 // pred_fallthru
      _
    %v111 = vld [vmem:[#allocation2] sm:$0xf]
    %v112 = vld [vmem:[#allocation2 + $0x4] sm:$0xf]
    %v113 = vld [vmem:[#allocation2 + $0x8] sm:$0xf]
    %v114 = vld [vmem:[#allocation2 + $0xc] sm:$0xf]
    %v115 = vld [vmem:[#allocation2 + $0x10] sm:$0xf]
    %v116 = vld [vmem:[#allocation2 + $0x14] sm:$0xf]
    %v117 = vld [vmem:[#allocation2 + $0x18] sm:$0xf]
    %v118 = vld [vmem:[#allocation2 + $0x1c] sm:$0xf]
    %v119 = vld [vmem:[#allocation2 + $0x20] sm:$0xf]
    %v120 = vld [vmem:[#allocation2 + $0x24] sm:$0xf]
    %v121 = vld [vmem:[#allocation2 + $0x28] sm:$0xf]
    %v122 = vld [vmem:[#allocation2 + $0x2c] sm:$0xf]
    %v123 = vld [vmem:[#allocation2 + $0x30] sm:$0xf]
    %v124 = vld [vmem:[#allocation2 + $0x34] sm:$0xf]
    %v125 = vld [vmem:[#allocation2 + $0x38] sm:$0xf]
    %v126 = vld [vmem:[#allocation2 + $0x3c] sm:$0xf]
    %v127 = vld [vmem:[#allocation5] sm:$0xf]
    %v128 = vld [vmem:[#allocation5 + $0x4] sm:$0xf]
    %v129 = vld [vmem:[#allocation5 + $0x8] sm:$0xf]
    %v130 = vld [vmem:[#allocation5 + $0xc] sm:$0xf]
    %v131 = vld [vmem:[#allocation5 + $0x10] sm:$0xf]
    %v132 = vld [vmem:[#allocation5 + $0x14] sm:$0xf]
    %v133 = vld [vmem:[#allocation5 + $0x18] sm:$0xf]
    %v134 = vld [vmem:[#allocation5 + $0x1c] sm:$0xf]
    %v135 = vld [vmem:[#allocation5 + $0x20] sm:$0xf]
    %v136 = vld [vmem:[#allocation5 + $0x24] sm:$0xf]
    %v137 = vld [vmem:[#allocation5 + $0x28] sm:$0xf]
    %v138 = vld [vmem:[#allocation5 + $0x2c] sm:$0xf]
    %v139 = vld [vmem:[#allocation5 + $0x30] sm:$0xf]
    %v140 = vld [vmem:[#allocation5 + $0x34] sm:$0xf]
    %v141 = vld [vmem:[#allocation5 + $0x38] sm:$0xf]
    %v142 = vld [vmem:[#allocation5 + $0x3c] sm:$0xf]
    %v143 = vld [vmem:[%s2] sm:$0x1]
    %v145 = vperm.slane %v143, 0
    %v163 = vunpack.c.l.b16 %v111
    %v164 = vunpack.c.l.b16 %v112
    %v165 = vunpack.c.l.b16 %v113
    %v166 = vunpack.c.l.b16 %v114
    %v167 = vunpack.c.l.b16 %v115
    %v168 = vunpack.c.l.b16 %v116
    %v169 = vunpack.c.l.b16 %v117
    %v170 = vunpack.c.l.b16 %v118
    %v171 = vunpack.c.l.b16 %v119
    %v172 = vunpack.c.l.b16 %v120
    %v173 = vunpack.c.l.b16 %v121
    %v174 = vunpack.c.l.b16 %v122
    %v175 = vunpack.c.l.b16 %v123
    %v176 = vunpack.c.l.b16 %v124
    %v177 = vunpack.c.l.b16 %v125
    %v178 = vunpack.c.l.b16 %v126
    %v179 = vpack.c.b16 %v164, %v163
    %v180 = vpack.c.b16 %v166, %v165
    %v181 = vpack.c.b16 %v168, %v167
    %v182 = vpack.c.b16 %v170, %v169
    %v183 = vpack.c.b16 %v172, %v171
    %v184 = vpack.c.b16 %v174, %v173
    %v185 = vpack.c.b16 %v176, %v175
    %v186 = vpack.c.b16 %v178, %v177
    %v211 = vunpack.c.l.b16 %v127
    %v212 = vunpack.c.l.b16 %v128
    %v213 = vunpack.c.l.b16 %v129
    %v214 = vunpack.c.l.b16 %v130
    %v215 = vunpack.c.l.b16 %v131
    %v216 = vunpack.c.l.b16 %v132
    %v217 = vunpack.c.l.b16 %v133
    %v218 = vunpack.c.l.b16 %v134
    %v219 = vunpack.c.l.b16 %v135
    %v220 = vunpack.c.l.b16 %v136
    %v221 = vunpack.c.l.b16 %v137
    %v222 = vunpack.c.l.b16 %v138
    %v223 = vunpack.c.l.b16 %v139
    %v224 = vunpack.c.l.b16 %v140
    %v225 = vunpack.c.l.b16 %v141
    %v226 = vunpack.c.l.b16 %v142
    %v227 = vpack.c.b16 %v212, %v211
    %v228 = vpack.c.b16 %v214, %v213
    %v229 = vpack.c.b16 %v216, %v215
    %v230 = vpack.c.b16 %v218, %v217
    %v231 = vpack.c.b16 %v220, %v219
    %v232 = vpack.c.b16 %v222, %v221
    %v233 = vpack.c.b16 %v224, %v223
    %v234 = vpack.c.b16 %v226, %v225
    %243 = vmatpush.bf16.msra.mxu0 %v234
    %244 = vmatpush.bf16.msra.mxu0 %v233
    %245 = vmatpush.bf16.msra.mxu0 %v232
    %246 = vmatpush.bf16.msra.mxu0 %v231
    %247 = vmatpush.bf16.msra.mxu0 %v230
    %248 = vmatpush.bf16.msra.mxu0 %v229
    %249 = vmatpush.bf16.msra.mxu0 %v228
    %250 = vmatpush.bf16.msra.mxu0 %v227
    %251 = vmatmul.bf16.gmra.mxu0 %v179
    %v252 = vpop.f32.mrf.mxu0
    %v253 = vadd.f32 %v145, %v252
    %v254 = vpop.f32.mrf.mxu0
    %v255 = vadd.f32 %v145, %v254
    %256 = vmatmul.bf16.gmra.mxu0 %v180
    %v257 = vpop.f32.mrf.mxu0
    %v258 = vadd.f32 %v145, %v257
    %v259 = vpop.f32.mrf.mxu0
    %v260 = vadd.f32 %v145, %v259
    %261 = vmatmul.bf16.gmra.mxu0 %v181
    %v262 = vpop.f32.mrf.mxu0
    %v263 = vadd.f32 %v145, %v262
    %v264 = vpop.f32.mrf.mxu0
    %v265 = vadd.f32 %v145, %v264
    %266 = vmatmul.bf16.gmra.mxu0 %v182
    %v267 = vpop.f32.mrf.mxu0
    %v268 = vadd.f32 %v145, %v267
    %v269 = vpop.f32.mrf.mxu0
    %v270 = vadd.f32 %v145, %v269
    %271 = vmatmul.bf16.gmra.mxu0 %v183
    %v272 = vpop.f32.mrf.mxu0
    %v273 = vadd.f32 %v145, %v272
    %v274 = vpop.f32.mrf.mxu0
    %v275 = vadd.f32 %v145, %v274
    %276 = vmatmul.bf16.gmra.mxu0 %v184
    %v277 = vpop.f32.mrf.mxu0
    %v278 = vadd.f32 %v145, %v277
    %v279 = vpop.f32.mrf.mxu0
    %v280 = vadd.f32 %v145, %v279
    %281 = vmatmul.bf16.gmra.mxu0 %v185
    %v282 = vpop.f32.mrf.mxu0
    %v283 = vadd.f32 %v145, %v282
    %v284 = vpop.f32.mrf.mxu0
    %v285 = vadd.f32 %v145, %v284
    %286 = vmatmul.bf16.gmra.mxu0 %v186
    %v287 = vpop.f32.mrf.mxu0
    %v288 = vadd.f32 %v145, %v287
    %v289 = vpop.f32.mrf.mxu0
    %v290 = vadd.f32 %v145, %v289
    %291 = vdwg.mxu0
    %v292 = vmax.f32 %v253, 0.0
    %v293 = vmax.f32 %v255, 0.0
    %v294 = vmax.f32 %v258, 0.0
    %v295 = vmax.f32 %v260, 0.0
    %v296 = vmax.f32 %v263, 0.0
    %v297 = vmax.f32 %v265, 0.0
    %v298 = vmax.f32 %v268, 0.0
    %v299 = vmax.f32 %v270, 0.0
    %v300 = vmax.f32 %v273, 0.0
    %v301 = vmax.f32 %v275, 0.0
    %v302 = vmax.f32 %v278, 0.0
    %v303 = vmax.f32 %v280, 0.0
    %v304 = vmax.f32 %v283, 0.0
    %v305 = vmax.f32 %v285, 0.0
    %v306 = vmax.f32 %v288, 0.0
    %v307 = vmax.f32 %v290, 0.0
    %v308 = vpack.c.bf16 %v293, %v292
    %v309 = vpack.c.bf16 %v295, %v294
    %v310 = vpack.c.bf16 %v297, %v296
    %v311 = vpack.c.bf16 %v299, %v298
    %v312 = vpack.c.bf16 %v301, %v300
    %v313 = vpack.c.bf16 %v303, %v302
    %v314 = vpack.c.bf16 %v305, %v304
    %v315 = vpack.c.bf16 %v307, %v306
    %v316 = vld [vmem:[#allocation7] sm:$0xf]
    %v317 = vld [vmem:[#allocation7 + $0x4] sm:$0xf]
    %v318 = vld [vmem:[#allocation7 + $0x8] sm:$0xf]
    %v319 = vld [vmem:[#allocation7 + $0xc] sm:$0xf]
    %v320 = vld [vmem:[#allocation7 + $0x10] sm:$0xf]
    %v321 = vld [vmem:[#allocation7 + $0x14] sm:$0xf]
    %v322 = vld [vmem:[#allocation7 + $0x18] sm:$0xf]
    %v323 = vld [vmem:[#allocation7 + $0x1c] sm:$0xf]
    %v324 = vld [vmem:[#allocation7 + $0x20] sm:$0xf]
    %v325 = vld [vmem:[#allocation7 + $0x24] sm:$0xf]
    %v326 = vld [vmem:[#allocation7 + $0x28] sm:$0xf]
    %v327 = vld [vmem:[#allocation7 + $0x2c] sm:$0xf]
    %v328 = vld [vmem:[#allocation7 + $0x30] sm:$0xf]
    %v329 = vld [vmem:[#allocation7 + $0x34] sm:$0xf]
    %v330 = vld [vmem:[#allocation7 + $0x38] sm:$0xf]
    %v331 = vld [vmem:[#allocation7 + $0x3c] sm:$0xf]
    %v332 = vld [vmem:[%s4] sm:$0x1]
    %v334 = vperm.slane %v332, 0
    %v352 = vunpack.c.l.b16 %v316
    %v353 = vunpack.c.l.b16 %v317
    %v354 = vunpack.c.l.b16 %v318
    %v355 = vunpack.c.l.b16 %v319
    %v356 = vunpack.c.l.b16 %v320
    %v357 = vunpack.c.l.b16 %v321
    %v358 = vunpack.c.l.b16 %v322
    %v359 = vunpack.c.l.b16 %v323
    %v360 = vunpack.c.l.b16 %v324
    %v361 = vunpack.c.l.b16 %v325
    %v362 = vunpack.c.l.b16 %v326
    %v363 = vunpack.c.l.b16 %v327
    %v364 = vunpack.c.l.b16 %v328
    %v365 = vunpack.c.l.b16 %v329
    %v366 = vunpack.c.l.b16 %v330
    %v367 = vunpack.c.l.b16 %v331
    %v368 = vpack.c.b16 %v353, %v352
    %v369 = vpack.c.b16 %v355, %v354
    %v370 = vpack.c.b16 %v357, %v356
    %v371 = vpack.c.b16 %v359, %v358
    %v372 = vpack.c.b16 %v361, %v360
    %v373 = vpack.c.b16 %v363, %v362
    %v374 = vpack.c.b16 %v365, %v364
    %v375 = vpack.c.b16 %v367, %v366
    %384 = vmatpush.bf16.msra.mxu0 %v375
    %385 = vmatpush.bf16.msra.mxu0 %v374
    %386 = vmatpush.bf16.msra.mxu0 %v373
    %387 = vmatpush.bf16.msra.mxu0 %v372
    %388 = vmatpush.bf16.msra.mxu0 %v371
    %389 = vmatpush.bf16.msra.mxu0 %v370
    %390 = vmatpush.bf16.msra.mxu0 %v369
    %391 = vmatpush.bf16.msra.mxu0 %v368
    %392 = vmatmul.bf16.gmra.mxu0 %v308
    %v393 = vpop.f32.mrf.mxu0
    %v394 = vadd.f32 %v334, %v393
    %v395 = vpop.f32.mrf.mxu0
    %v396 = vadd.f32 %v334, %v395
    %397 = vmatmul.bf16.gmra.mxu0 %v309
    %v398 = vpop.f32.mrf.mxu0
    %v399 = vadd.f32 %v334, %v398
    %v400 = vpop.f32.mrf.mxu0
    %v401 = vadd.f32 %v334, %v400
    %402 = vmatmul.bf16.gmra.mxu0 %v310
    %v403 = vpop.f32.mrf.mxu0
    %v404 = vadd.f32 %v334, %v403
    %v405 = vpop.f32.mrf.mxu0
    %v406 = vadd.f32 %v334, %v405
    %407 = vmatmul.bf16.gmra.mxu0 %v311
    %v408 = vpop.f32.mrf.mxu0
    %v409 = vadd.f32 %v334, %v408
    %v410 = vpop.f32.mrf.mxu0
    %v411 = vadd.f32 %v334, %v410
    %412 = vmatmul.bf16.gmra.mxu0 %v312
    %v413 = vpop.f32.mrf.mxu0
    %v414 = vadd.f32 %v334, %v413
    %v415 = vpop.f32.mrf.mxu0
    %v416 = vadd.f32 %v334, %v415
    %417 = vmatmul.bf16.gmra.mxu0 %v313
    %v418 = vpop.f32.mrf.mxu0
    %v419 = vadd.f32 %v334, %v418
    %v420 = vpop.f32.mrf.mxu0
    %v421 = vadd.f32 %v334, %v420
    %422 = vmatmul.bf16.gmra.mxu0 %v314
    %v423 = vpop.f32.mrf.mxu0
    %v424 = vadd.f32 %v334, %v423
    %v425 = vpop.f32.mrf.mxu0
    %v426 = vadd.f32 %v334, %v425
    %427 = vmatmul.bf16.gmra.mxu0 %v315
    %v428 = vpop.f32.mrf.mxu0
    %v429 = vadd.f32 %v334, %v428
    %v430 = vpop.f32.mrf.mxu0
    %v431 = vadd.f32 %v334, %v430
    %432 = vdwg.mxu0
    %v433 = vmax.f32 %v394, 0.0
    %v434 = vmax.f32 %v396, 0.0
    %v435 = vmax.f32 %v399, 0.0
    %v436 = vmax.f32 %v401, 0.0
    %v437 = vmax.f32 %v404, 0.0
    %v438 = vmax.f32 %v406, 0.0
    %v439 = vmax.f32 %v409, 0.0
    %v440 = vmax.f32 %v411, 0.0
    %v441 = vmax.f32 %v414, 0.0
    %v442 = vmax.f32 %v416, 0.0
    %v443 = vmax.f32 %v419, 0.0
    %v444 = vmax.f32 %v421, 0.0
    %v445 = vmax.f32 %v424, 0.0
    %v446 = vmax.f32 %v426, 0.0
    %v447 = vmax.f32 %v429, 0.0
    %v448 = vmax.f32 %v431, 0.0
    %v449 = vpack.c.bf16 %v434, %v433
    %v450 = vpack.c.bf16 %v436, %v435
    %v451 = vpack.c.bf16 %v438, %v437
    %v452 = vpack.c.bf16 %v440, %v439
    %v453 = vpack.c.bf16 %v442, %v441
    %v454 = vpack.c.bf16 %v444, %v443
    %v455 = vpack.c.bf16 %v446, %v445
    %v456 = vpack.c.bf16 %v448, %v447
    %v457 = vld [vmem:[#allocation8] sm:$0xf]
    %v458 = vld [vmem:[#allocation8 + $0x4] sm:$0xf]
    %v459 = vld [vmem:[#allocation8 + $0x8] sm:$0xf]
    %v460 = vld [vmem:[#allocation8 + $0xc] sm:$0xf]
    %v461 = vld [vmem:[#allocation8 + $0x10] sm:$0xf]
    %v462 = vld [vmem:[#allocation8 + $0x14] sm:$0xf]
    %v463 = vld [vmem:[#allocation8 + $0x18] sm:$0xf]
    %v464 = vld [vmem:[#allocation8 + $0x1c] sm:$0xf]
    %v465 = vld [vmem:[#allocation8 + $0x20] sm:$0xf]
    %v466 = vld [vmem:[#allocation8 + $0x24] sm:$0xf]
    %v467 = vld [vmem:[#allocation8 + $0x28] sm:$0xf]
    %v468 = vld [vmem:[#allocation8 + $0x2c] sm:$0xf]
    %v469 = vld [vmem:[#allocation8 + $0x30] sm:$0xf]
    %v470 = vld [vmem:[#allocation8 + $0x34] sm:$0xf]
    %v471 = vld [vmem:[#allocation8 + $0x38] sm:$0xf]
    %v472 = vld [vmem:[#allocation8 + $0x3c] sm:$0xf]
    %v473 = vld [vmem:[%s6] sm:$0x1]
    %v475 = vperm.slane %v473, 0
    %v493 = vunpack.c.l.b16 %v457
    %v494 = vunpack.c.l.b16 %v458
    %v495 = vunpack.c.l.b16 %v459
    %v496 = vunpack.c.l.b16 %v460
    %v497 = vunpack.c.l.b16 %v461
    %v498 = vunpack.c.l.b16 %v462
    %v499 = vunpack.c.l.b16 %v463
    %v500 = vunpack.c.l.b16 %v464
    %v501 = vunpack.c.l.b16 %v465
    %v502 = vunpack.c.l.b16 %v466
    %v503 = vunpack.c.l.b16 %v467
    %v504 = vunpack.c.l.b16 %v468
    %v505 = vunpack.c.l.b16 %v469
    %v506 = vunpack.c.l.b16 %v470
    %v507 = vunpack.c.l.b16 %v471
    %v508 = vunpack.c.l.b16 %v472
    %v509 = vpack.c.b16 %v494, %v493
    %v510 = vpack.c.b16 %v496, %v495
    %v511 = vpack.c.b16 %v498, %v497
    %v512 = vpack.c.b16 %v500, %v499
    %v513 = vpack.c.b16 %v502, %v501
    %v514 = vpack.c.b16 %v504, %v503
    %v515 = vpack.c.b16 %v506, %v505
    %v516 = vpack.c.b16 %v508, %v507
    %525 = vmatpush.bf16.msra.mxu0 %v516
    %526 = vmatpush.bf16.msra.mxu0 %v515
    %527 = vmatpush.bf16.msra.mxu0 %v514
    %528 = vmatpush.bf16.msra.mxu0 %v513
    %529 = vmatpush.bf16.msra.mxu0 %v512
    %530 = vmatpush.bf16.msra.mxu0 %v511
    %531 = vmatpush.bf16.msra.mxu0 %v510
    %532 = vmatpush.bf16.msra.mxu0 %v509
    %533 = vmatmul.bf16.gmra.mxu0 %v449
    %v534 = vpop.f32.mrf.mxu0
    %v535 = vadd.f32 %v475, %v534
    %v536 = vpop.f32.mrf.mxu0
    %v537 = vadd.f32 %v475, %v536
    %538 = vmatmul.bf16.gmra.mxu0 %v450
    %v539 = vpop.f32.mrf.mxu0
    %v540 = vadd.f32 %v475, %v539
    %v541 = vpop.f32.mrf.mxu0
    %v542 = vadd.f32 %v475, %v541
    %543 = vmatmul.bf16.gmra.mxu0 %v451
    %v544 = vpop.f32.mrf.mxu0
    %v545 = vadd.f32 %v475, %v544
    %v546 = vpop.f32.mrf.mxu0
    %v547 = vadd.f32 %v475, %v546
    %548 = vmatmul.bf16.gmra.mxu0 %v452
    %v549 = vpop.f32.mrf.mxu0
    %v550 = vadd.f32 %v475, %v549
    %v551 = vpop.f32.mrf.mxu0
    %v552 = vadd.f32 %v475, %v551
    %553 = vmatmul.bf16.gmra.mxu0 %v453
    %v554 = vpop.f32.mrf.mxu0
    %v555 = vadd.f32 %v475, %v554
    %v556 = vpop.f32.mrf.mxu0
    %v557 = vadd.f32 %v475, %v556
    %558 = vmatmul.bf16.gmra.mxu0 %v454
    %v559 = vpop.f32.mrf.mxu0
    %v560 = vadd.f32 %v475, %v559
    %v561 = vpop.f32.mrf.mxu0
    %v562 = vadd.f32 %v475, %v561
    %563 = vmatmul.bf16.gmra.mxu0 %v455
    %v564 = vpop.f32.mrf.mxu0
    %v565 = vadd.f32 %v475, %v564
    %v566 = vpop.f32.mrf.mxu0
    %v567 = vadd.f32 %v475, %v566
    %568 = vmatmul.bf16.gmra.mxu0 %v456
    %v569 = vpop.f32.mrf.mxu0
    %v570 = vadd.f32 %v475, %v569
    %v571 = vpop.f32.mrf.mxu0
    %v572 = vadd.f32 %v475, %v571
    %573 = vdwg.mxu0
    %v574 = vmax.f32 %v535, 0.0
    %v575 = vmax.f32 %v537, 0.0
    %v576 = vmax.f32 %v540, 0.0
    %v577 = vmax.f32 %v542, 0.0
    %v578 = vmax.f32 %v545, 0.0
    %v579 = vmax.f32 %v547, 0.0
    %v580 = vmax.f32 %v550, 0.0
    %v581 = vmax.f32 %v552, 0.0
    %v582 = vmax.f32 %v555, 0.0
    %v583 = vmax.f32 %v557, 0.0
    %v584 = vmax.f32 %v560, 0.0
    %v585 = vmax.f32 %v562, 0.0
    %v586 = vmax.f32 %v565, 0.0
    %v587 = vmax.f32 %v567, 0.0
    %v588 = vmax.f32 %v570, 0.0
    %v589 = vmax.f32 %v572, 0.0
    %v590 = vpack.c.bf16 %v575, %v574
    %v591 = vpack.c.bf16 %v577, %v576
    %v592 = vpack.c.bf16 %v579, %v578
    %v593 = vpack.c.bf16 %v581, %v580
    %v594 = vpack.c.bf16 %v583, %v582
    %v595 = vpack.c.bf16 %v585, %v584
    %v596 = vpack.c.bf16 %v587, %v586
    %v597 = vpack.c.bf16 %v589, %v588
    %v598 = vld [vmem:[#allocation10] sm:$0xf]
    %v599 = vld [vmem:[#allocation10 + $0x4] sm:$0xf]
    %v600 = vld [vmem:[#allocation10 + $0x8] sm:$0xf]
    %v601 = vld [vmem:[#allocation10 + $0xc] sm:$0xf]
    %v602 = vld [vmem:[#allocation10 + $0x10] sm:$0xf]
    %v603 = vld [vmem:[#allocation10 + $0x14] sm:$0xf]
    %v604 = vld [vmem:[#allocation10 + $0x18] sm:$0xf]
    %v605 = vld [vmem:[#allocation10 + $0x1c] sm:$0xf]
    %v606 = vld [vmem:[#allocation10 + $0x20] sm:$0xf]
    %v607 = vld [vmem:[#allocation10 + $0x24] sm:$0xf]
    %v608 = vld [vmem:[#allocation10 + $0x28] sm:$0xf]
    %v609 = vld [vmem:[#allocation10 + $0x2c] sm:$0xf]
    %v610 = vld [vmem:[#allocation10 + $0x30] sm:$0xf]
    %v611 = vld [vmem:[#allocation10 + $0x34] sm:$0xf]
    %v612 = vld [vmem:[#allocation10 + $0x38] sm:$0xf]
    %v613 = vld [vmem:[#allocation10 + $0x3c] sm:$0xf]
    %v614 = vld [vmem:[%s8] sm:$0x1]
    %v616 = vperm.slane %v614, 0
    %v634 = vunpack.c.l.b16 %v598
    %v635 = vunpack.c.l.b16 %v599
    %v636 = vunpack.c.l.b16 %v600
    %v637 = vunpack.c.l.b16 %v601
    %v638 = vunpack.c.l.b16 %v602
    %v639 = vunpack.c.l.b16 %v603
    %v640 = vunpack.c.l.b16 %v604
    %v641 = vunpack.c.l.b16 %v605
    %v642 = vunpack.c.l.b16 %v606
    %v643 = vunpack.c.l.b16 %v607
    %v644 = vunpack.c.l.b16 %v608
    %v645 = vunpack.c.l.b16 %v609
    %v646 = vunpack.c.l.b16 %v610
    %v647 = vunpack.c.l.b16 %v611
    %v648 = vunpack.c.l.b16 %v612
    %v649 = vunpack.c.l.b16 %v613
    %v650 = vpack.c.b16 %v635, %v634
    %v651 = vpack.c.b16 %v637, %v636
    %v652 = vpack.c.b16 %v639, %v638
    %v653 = vpack.c.b16 %v641, %v640
    %v654 = vpack.c.b16 %v643, %v642
    %v655 = vpack.c.b16 %v645, %v644
    %v656 = vpack.c.b16 %v647, %v646
    %v657 = vpack.c.b16 %v649, %v648
    %666 = vmatpush.bf16.msra.mxu0 %v657
    %667 = vmatpush.bf16.msra.mxu0 %v656
    %668 = vmatpush.bf16.msra.mxu0 %v655
    %669 = vmatpush.bf16.msra.mxu0 %v654
    %670 = vmatpush.bf16.msra.mxu0 %v653
    %671 = vmatpush.bf16.msra.mxu0 %v652
    %672 = vmatpush.bf16.msra.mxu0 %v651
    %673 = vmatpush.bf16.msra.mxu0 %v650
    %674 = vmatmul.bf16.gmra.mxu0 %v590
    %v675 = vpop.f32.mrf.mxu0
    %v676 = vadd.f32 %v616, %v675
    %v677 = vpop.f32.mrf.mxu0
    %v678 = vadd.f32 %v616, %v677
    %679 = vmatmul.bf16.gmra.mxu0 %v591
    %v680 = vpop.f32.mrf.mxu0
    %v681 = vadd.f32 %v616, %v680
    %v682 = vpop.f32.mrf.mxu0
    %v683 = vadd.f32 %v616, %v682
    %684 = vmatmul.bf16.gmra.mxu0 %v592
    %v685 = vpop.f32.mrf.mxu0
    %v686 = vadd.f32 %v616, %v685
    %v687 = vpop.f32.mrf.mxu0
    %v688 = vadd.f32 %v616, %v687
    %689 = vmatmul.bf16.gmra.mxu0 %v593
    %v690 = vpop.f32.mrf.mxu0
    %v691 = vadd.f32 %v616, %v690
    %v692 = vpop.f32.mrf.mxu0
    %v693 = vadd.f32 %v616, %v692
    %694 = vmatmul.bf16.gmra.mxu0 %v594
    %v695 = vpop.f32.mrf.mxu0
    %v696 = vadd.f32 %v616, %v695
    %v697 = vpop.f32.mrf.mxu0
    %v698 = vadd.f32 %v616, %v697
    %699 = vmatmul.bf16.gmra.mxu0 %v595
    %v700 = vpop.f32.mrf.mxu0
    %v701 = vadd.f32 %v616, %v700
    %v702 = vpop.f32.mrf.mxu0
    %v703 = vadd.f32 %v616, %v702
    %704 = vmatmul.bf16.gmra.mxu0 %v596
    %v705 = vpop.f32.mrf.mxu0
    %v706 = vadd.f32 %v616, %v705
    %v707 = vpop.f32.mrf.mxu0
    %v708 = vadd.f32 %v616, %v707
    %709 = vmatmul.bf16.gmra.mxu0 %v597
    %v710 = vpop.f32.mrf.mxu0
    %v711 = vadd.f32 %v616, %v710
    %v712 = vpop.f32.mrf.mxu0
    %v713 = vadd.f32 %v616, %v712
    %714 = vdwg.mxu0
    %715 = vst [vmem:[#allocation11] sm:$0xff] %v676
    %716 = vst [vmem:[#allocation11 + $0x8] sm:$0xff] %v678
    %717 = vst [vmem:[#allocation11 + $0x10] sm:$0xff] %v681
    %718 = vst [vmem:[#allocation11 + $0x18] sm:$0xff] %v683
    %719 = vst [vmem:[#allocation11 + $0x20] sm:$0xff] %v686
    %720 = vst [vmem:[#allocation11 + $0x28] sm:$0xff] %v688
    %721 = vst [vmem:[#allocation11 + $0x30] sm:$0xff] %v691
    %722 = vst [vmem:[#allocation11 + $0x38] sm:$0xff] %v693
    %723 = vst [vmem:[#allocation11 + $0x40] sm:$0xff] %v696
    %724 = vst [vmem:[#allocation11 + $0x48] sm:$0xff] %v698
    %725 = vst [vmem:[#allocation11 + $0x50] sm:$0xff] %v701
    %726 = vst [vmem:[#allocation11 + $0x58] sm:$0xff] %v703
    %727 = vst [vmem:[#allocation11 + $0x60] sm:$0xff] %v706
    %728 = vst [vmem:[#allocation11 + $0x68] sm:$0xff] %v708
    %729 = vst [vmem:[#allocation11 + $0x70] sm:$0xff] %v711
    %730 = vst [vmem:[#allocation11 + $0x78] sm:$0xff] %v713
    // Predicated region
    $region58: #{tpu_custom_call.1} parent=1 // pred_check
      _
    $region59: #{tpu_custom_call.1} parent=1 // pred_check_branch
      %732 = sbr.rel (0) target = $region61
    $region60: #{tpu_custom_call.1} parent=1 // pred_region
      %734 = vsyncadd [#allocation4], 0
      %s735 = sshll.u32 [#allocation11], 4
      %s736 = int_to_ptr.vmem [resolvable:$true] %s735
      %s737 = sshll.u32 %s9, 4
      %s738 = int_to_ptr.hbm [resolvable:$true] %s737
      %743 = dma.vmem_to_hbm [thread:$0]  %s736, 2048, %s738, [#allocation4], 128, 128, 8
    $region61: #{tpu_custom_call.1} parent=1 // pred_fallthru
      _
    // Predicated region
    $region62: #{tpu_custom_call.1} parent=1 // pred_check
      _
    $region63: #{tpu_custom_call.1} parent=1 // pred_check_branch
      %745 = sbr.rel (0) target = $region65
    $region64: #{tpu_custom_call.1} parent=1 // pred_region
      %747 = dma.done [#allocation4], 2048
    $region65: #{tpu_custom_call.1} parent=1 // pred_fallthru
      _
    %748 = vsyncpa [#allocation3], 1
    %749 = vsyncpa [#allocation6], 1
    %750 = vsyncpa [#allocation9], 1
    %751 = vsyncpa [#allocation4], 1

</llo_original>
